<compile_context>
chip_gen: v6e
topology: v6e:2x2x1
jax: 0.10.0
libtpu: 0.0.40
codegen_flags: <defaults>
</compile_context>

<pallas_src>
import jax
import jax.numpy as jnp
import numpy as np
from jax.experimental import pallas as pl
from jax.experimental.pallas import tpu as pltpu


# ----------------------------- Pallas kernel -------------------------------


def mlp2hl_kernel(x_ref, wa1_ref, wa2_ref, wa3_ref, out_ref):
    """Fused 3-layer MLP for one row tile (rows = batch elements).

    x_ref   : (TM, F)       flattened input rows (F = 3 * winsize)
    wa1_ref : (F  + 1, H1)  rows [0:F]  = W1^T,  row F  = b1
    wa2_ref : (H1 + 1, H2)  rows [0:H1] = W2^T,  row H1 = b2
    wa3_ref : (2, H2)       row 0 = w3 (output weights), row 1 lane 0 = b3
    out_ref : (TM, 1)       one logit per row (narrow output -> 4 B/row HBM)
    """
    f = wa1_ref.shape[0] - 1     # e.g. 48
    h1 = wa2_ref.shape[0] - 1    # e.g. 32

    x = x_ref[...]

    # Layer 1: Linear(F, H1) + ReLU  (bias row = static sublane-aligned slice).
    z1 = jnp.dot(x, wa1_ref[0:f, :], preferred_element_type=jnp.float32)
    z1 = jnp.maximum(z1 + wa1_ref[f:f + 1, :], 0.0)

    # Layer 2: Linear(H1, H2) + ReLU.
    z2 = jnp.dot(z1, wa2_ref[0:h1, :], preferred_element_type=jnp.float32)
    z2 = jnp.maximum(z2 + wa2_ref[h1:h1 + 1, :], 0.0)

    # Output layer: Linear(H2, 1) as VPU multiply + lane reduce (no padded
    # matmul, no wide output slab).
    w3 = wa3_ref[0:1, :]                       # (1, H2)
    b3 = wa3_ref[1:2, 0:1]                     # (1, 1)
    out_ref[...] = jnp.sum(z2 * w3, axis=1, keepdims=True) + b3


# --------------------- one-time parameter preparation -----------------------


def prepare_params(params):
    """Pack PyTorch-layout Linear params into kernel operands.  Call ONCE at
    init (this is the work that used to run on every forward call)."""
    f32 = jnp.float32
    w1 = jnp.asarray(params["w1"], f32)   # (H1, F)
    b1 = jnp.asarray(params["b1"], f32)   # (H1,)
    w2 = jnp.asarray(params["w2"], f32)   # (H2, H1)
    b2 = jnp.asarray(params["b2"], f32)   # (H2,)
    w3 = jnp.asarray(params["w3"], f32)   # (1, H2)
    b3 = jnp.asarray(params["b3"], f32)   # (1,)
    H1 = w1.shape[0]
    H2 = w2.shape[0]

    wa1 = jnp.concatenate([w1.T, b1.reshape(1, H1)], axis=0)    # (F+1, H1)
    wa2 = jnp.concatenate([w2.T, b2.reshape(1, H2)], axis=0)    # (H1+1, H2)
    b3_row = jnp.zeros((1, H2), f32).at[0, 0].set(b3[0])
    wa3 = jnp.concatenate([w3.reshape(1, H2), b3_row], axis=0)  # (2, H2)
    return {"wa1": wa1, "wa2": wa2, "wa3": wa3}


# ------------------------------- forward ------------------------------------


def _round_up(n, m):
    return ((n + m - 1) // m) * m


def mlp2hl_forward(x, packed):
    """x: (B, 3, winsize) -> logits (B, 1) float32.  `packed` = prepare_params(...)."""
    B = x.shape[0]
    x_flat = x.reshape(B, -1).astype(jnp.float32)     # (B, F); reshape is a bitcast
    F = x_flat.shape[1]

    # Row tile: large tiles for large batches, but keep >= 2 grid steps when
    # possible so the "parallel" axis can occupy both TensorCores on v7x.
    if B <= 8:
        rows = 8
        TM = 8
        x_in = (jnp.zeros((8, F), jnp.float32).at[:B, :].set(x_flat)
                if B < 8 else x_flat)                 # tiny one-off pad only
    else:
        rows = B                                       # no copy, no padding
        TM = min(1024, _round_up(pl.cdiv(B, 2), 8))
        x_in = x_flat

    grid = (pl.cdiv(rows, TM),)

    out = pl.pallas_call(
        mlp2hl_kernel,
        out_shape=jax.ShapeDtypeStruct((rows, 1), jnp.float32),
        grid=grid,
        in_specs=[
            pl.BlockSpec((TM, F), lambda i: (i, 0)),            # row tile of x
            pl.BlockSpec(packed["wa1"].shape, lambda i: (0, 0)),  # resident weights
            pl.BlockSpec(packed["wa2"].shape, lambda i: (0, 0)),
            pl.BlockSpec(packed["wa3"].shape, lambda i: (0, 0)),
        ],
        out_specs=pl.BlockSpec((TM, 1), lambda i: (i, 0)),
        compiler_params=pltpu.CompilerParams(
            dimension_semantics=("parallel",)),                  # megacore on v7x
    )(x_in, packed["wa1"], packed["wa2"], packed["wa3"])

    return out[:B, :] if rows != B else out


# ------------------------- pure-JAX reference -------------------------------


def reference_forward(x, params):
    hp = jax.lax.Precision.HIGHEST
    xf = x.reshape(x.shape[0], -1).astype(jnp.float32)
    z1 = jnp.maximum(jnp.dot(xf, params["w1"].T, precision=hp) + params["b1"], 0.0)
    z2 = jnp.maximum(jnp.dot(z1, params["w2"].T, precision=hp) + params["b2"], 0.0)
    return jnp.dot(z2, params["w3"].T, precision=hp) + params["b3"]


# --------------------------------- main --------------------------------------


if __name__ == "__main__":
    winsize = 16
    n_hl = (32, 16)
    f_in = 3 * winsize  # 48

    key = jax.random.PRNGKey(0)
    k_x, k_x2, k1, kb1, k2, kb2, k3, kb3 = jax.random.split(key, 8)

    # Deterministic synthetic parameters (PyTorch-style uniform init bounds).
    s1 = 1.0 / np.sqrt(f_in)
    s2 = 1.0 / np.sqrt(n_hl[0])
    s3 = 1.0 / np.sqrt(n_hl[1])
    params = {
        "w1": jax.random.uniform(k1, (n_hl[0], f_in), jnp.float32, -s1, s1),
        "b1": jax.random.uniform(kb1, (n_hl[0],), jnp.float32, -s1, s1),
        "w2": jax.random.uniform(k2, (n_hl[1], n_hl[0]), jnp.float32, -s2, s2),
        "b2": jax.random.uniform(kb2, (n_hl[1],), jnp.float32, -s2, s2),
        "w3": jax.random.uniform(k3, (1, n_hl[1]), jnp.float32, -s3, s3),
        "b3": jax.random.uniform(kb3, (1,), jnp.float32, -s3, s3),
    }

    packed = prepare_params(params)            # one-time, init-side packing
    fwd = jax.jit(lambda xx: mlp2hl_forward(xx, packed))

    # Tolerances allow for the MXU's reduced-precision default passes on f32
    # matmuls; typical deviation vs the HIGHEST-precision reference is ~1e-3.
    TOL = dict(rtol=1e-2, atol=5e-3)

    # Tiny batch (module-typical shape): single-tile path.
    x_small = jax.random.normal(k_x, (2, 3, winsize), jnp.float32)
    out_small = jax.block_until_ready(fwd(x_small))
    np.testing.assert_allclose(np.asarray(out_small),
                               np.asarray(reference_forward(x_small, params)), **TOL)

    # Larger batch: multi-step "parallel" grid with a ragged last tile.
    x_big = jax.random.normal(k_x2, (300, 3, winsize), jnp.float32)
    out_big = jax.block_until_ready(fwd(x_big))
    np.testing.assert_allclose(np.asarray(out_big),
                               np.asarray(reference_forward(x_big, params)), **TOL)

    print("KERNEL_OK")
</pallas_src>

<mosaic_0001>
module attributes {stable_mosaic.version = 11 : i64} {
  func.func @mlp2hl_kernel(%arg0: i32, %arg1: memref<8x48xf32, #tpu.memory_space<vmem>>, %arg2: memref<49x32xf32, #tpu.memory_space<vmem>>, %arg3: memref<33x16xf32, #tpu.memory_space<vmem>>, %arg4: memref<2x16xf32, #tpu.memory_space<vmem>>, %arg5: memref<8x1xf32, #tpu.memory_space<vmem>>) attributes {dimension_semantics = [#tpu.dimension_semantics<parallel>], iteration_bounds = array<i64: 1>, scalar_prefetch = 0 : i64, scratch_operands = 0 : i64, tpu.core_type = #tpu.core_type<tc>, window_params = [{transform_indices = @transform_0, window_bounds = array<i64: 8, 48>}, {pipeline_mode = #tpu.pipeline_mode<synchronous>, transform_indices = @transform_1, window_bounds = array<i64: 49, 32>}, {pipeline_mode = #tpu.pipeline_mode<synchronous>, transform_indices = @transform_2, window_bounds = array<i64: 33, 16>}, {pipeline_mode = #tpu.pipeline_mode<synchronous>, transform_indices = @transform_3, window_bounds = array<i64: 2, 16>}, {transform_indices = @transform_4, window_bounds = array<i64: 8, 1>}]} {
    %c0 = arith.constant 0 : index
    %c0_0 = arith.constant 0 : index
    %0 = vector.load %arg1[%c0, %c0_0] : memref<8x48xf32, #tpu.memory_space<vmem>>, vector<8x48xf32>
    %c0_1 = arith.constant 0 : index
    %c0_2 = arith.constant 0 : index
    %1 = vector.load %arg2[%c0_1, %c0_2] : memref<49x32xf32, #tpu.memory_space<vmem>>, vector<48x32xf32>
    %cst = arith.constant dense<0.000000e+00> : vector<8x32xf32>
    %2 = tpu.matmul %0, %1, %cst {dimension_numbers = #tpu.dot_dimension_numbers<[1], [0], [0], [1], [0, 0, 1, 1], [], []>} : vector<8x48xf32>, vector<48x32xf32>, vector<8x32xf32> -> vector<8x32xf32>
    %c48 = arith.constant 48 : index
    %c0_3 = arith.constant 0 : index
    %3 = vector.load %arg2[%c48, %c0_3] : memref<49x32xf32, #tpu.memory_space<vmem>>, vector<1x32xf32>
    %4 = vector.broadcast %3 : vector<1x32xf32> to vector<8x32xf32>
    %5 = arith.addf %2, %4 : vector<8x32xf32>
    %cst_4 = arith.constant 0.000000e+00 : f32
    %6 = vector.broadcast %cst_4 : f32 to vector<8x32xf32>
    %7 = arith.maximumf %5, %6 : vector<8x32xf32>
    %c0_5 = arith.constant 0 : index
    %c0_6 = arith.constant 0 : index
    %8 = vector.load %arg3[%c0_5, %c0_6] : memref<33x16xf32, #tpu.memory_space<vmem>>, vector<32x16xf32>
    %cst_7 = arith.constant dense<0.000000e+00> : vector<8x16xf32>
    %9 = tpu.matmul %7, %8, %cst_7 {dimension_numbers = #tpu.dot_dimension_numbers<[1], [0], [0], [1], [0, 0, 1, 1], [], []>} : vector<8x32xf32>, vector<32x16xf32>, vector<8x16xf32> -> vector<8x16xf32>
    %c32 = arith.constant 32 : index
    %c0_8 = arith.constant 0 : index
    %10 = vector.load %arg3[%c32, %c0_8] : memref<33x16xf32, #tpu.memory_space<vmem>>, vector<1x16xf32>
    %11 = vector.broadcast %10 : vector<1x16xf32> to vector<8x16xf32>
    %12 = arith.addf %9, %11 : vector<8x16xf32>
    %cst_9 = arith.constant 0.000000e+00 : f32
    %13 = vector.broadcast %cst_9 : f32 to vector<8x16xf32>
    %14 = arith.maximumf %12, %13 : vector<8x16xf32>
    %c0_10 = arith.constant 0 : index
    %c0_11 = arith.constant 0 : index
    %15 = vector.load %arg4[%c0_10, %c0_11] : memref<2x16xf32, #tpu.memory_space<vmem>>, vector<1x16xf32>
    %c1 = arith.constant 1 : index
    %c0_12 = arith.constant 0 : index
    %16 = vector.load %arg4[%c1, %c0_12] : memref<2x16xf32, #tpu.memory_space<vmem>>, vector<1x1xf32>
    %17 = vector.broadcast %15 : vector<1x16xf32> to vector<8x16xf32>
    %18 = arith.mulf %14, %17 : vector<8x16xf32>
    %cst_13 = arith.constant dense<0.000000e+00> : vector<8xf32>
    %19 = vector.multi_reduction <add>, %18, %cst_13 [1] : vector<8x16xf32> to vector<8xf32>
    %20 = vector.shape_cast %19 : vector<8xf32> to vector<8x1xf32>
    %21 = vector.broadcast %16 : vector<1x1xf32> to vector<8x1xf32>
    %22 = arith.addf %20, %21 : vector<8x1xf32>
    %c0_14 = arith.constant 0 : index
    %c0_15 = arith.constant 0 : index
    %23 = vector.load %arg5[%c0_14, %c0_15] : memref<8x1xf32, #tpu.memory_space<vmem>>, vector<8x1xf32>
    tpu.vector_store %arg5[%c0_14, %c0_15], %22 {strides = array<i32>} : memref<8x1xf32, #tpu.memory_space<vmem>>, vector<8x1xf32>,
    return
  }
  func.func @transform_0(%arg0: i32) -> (i32, i32) {
    %c0_i32 = arith.constant 0 : i32
    %c0_i32_0 = arith.constant 0 : i32
    return %arg0, %c0_i32 : i32, i32
  }
  func.func @transform_1(%arg0: i32) -> (i32, i32) {
    %c0_i32 = arith.constant 0 : i32
    %c0_i32_0 = arith.constant 0 : i32
    %c0_i32_1 = arith.constant 0 : i32
    return %c0_i32, %c0_i32_0 : i32, i32
  }
  func.func @transform_2(%arg0: i32) -> (i32, i32) {
    %c0_i32 = arith.constant 0 : i32
    %c0_i32_0 = arith.constant 0 : i32
    %c0_i32_1 = arith.constant 0 : i32
    return %c0_i32, %c0_i32_0 : i32, i32
  }
  func.func @transform_3(%arg0: i32) -> (i32, i32) {
    %c0_i32 = arith.constant 0 : i32
    %c0_i32_0 = arith.constant 0 : i32
    %c0_i32_1 = arith.constant 0 : i32
    return %c0_i32, %c0_i32_0 : i32, i32
  }
  func.func @transform_4(%arg0: i32) -> (i32, i32) {
    %c0_i32 = arith.constant 0 : i32
    %c0_i32_0 = arith.constant 0 : i32
    return %arg0, %c0_i32 : i32, i32
  }
}

</mosaic_0001>

<llo_original>
// kernel: _lambda_.1
$region0: #{_lambda_.1}
  #allocation0 [shape = 'u32[]', space=smem, size = 0x4, offset = 0x4, fixed_abs, tag = 'smem constant byte address 0x4 - core index']
  #allocation1 [shape = 'u32[144,128]{1,0:T(1,128)}', space=vmem, size = 0x12000, scoped, tag = 'internal scratch']
  %s0 = inlined_call_operand.vmem [shape: f32[8,48], index: 0, kind: input, shape index: {}]
  %s1 = inlined_call_operand.hbm [shape: f32[49,32], index: 1, kind: input, shape index: {}]
  %s2 = inlined_call_operand.hbm [shape: f32[33,16], index: 2, kind: input, shape index: {}]
  %s3 = inlined_call_operand.vmem [shape: f32[2,16], index: 3, kind: input, shape index: {}]
  %s4 = inlined_call_operand.vmem [shape: f32[8,1], index: 4, kind: output, shape index: {}]
  %s5 = sld [smem:[#allocation0]]
  $region34: #{_lambda_.1} parent=0
    _
  %s7 = ssub.s32 1, %s5
  %s8 = scalar_select 0, %s7, %s5
  $region1: #{_lambda_.1} parent=0
    #allocation2 [shape = 'u8[28672]{0}', space=vmem, size = 0x7000, scoped, tag = 'input window, operand 1, single buffered']
    #allocation3 [shape = 's32[1]{0}', space=sflag, size = 0x4, scoped, tag = 'scoped memory for _lambda_.1']
    #allocation4 [shape = 'u8[20480]{0}', space=vmem, size = 0x5000, scoped, tag = 'input window, operand 2, single buffered']
    #allocation5 [shape = 's32[1]{0}', space=sflag, size = 0x4, scoped, tag = 'scoped memory for _lambda_.1']
    %9 = vsyncpa [#allocation3], 0
    %10 = vsyncpa [#allocation5], 0
    // Predicated region
    $region2: #{_lambda_.1} parent=1 // pred_check
      _
    $region3: #{_lambda_.1} parent=1 // pred_check_branch
      %12 = sbr.rel (0) target = $region5
    $region4: #{_lambda_.1} parent=1 // pred_region
      _
    $region5: #{_lambda_.1} parent=1 // pred_fallthru
      _
    // Predicated region
    $region6: #{_lambda_.1} parent=1 // pred_check
      _
    $region7: #{_lambda_.1} parent=1 // pred_check_branch
      %14 = sbr.rel (0) target = $region9
    $region8: #{_lambda_.1} parent=1 // pred_region
      %s16 = ssub.s32 896, 896
      %17 = vsyncadd [#allocation3], %s16
      %s18 = sshll.u32 [#allocation2], 4
      %s19 = int_to_ptr.vmem [resolvable:$true] %s18
      %24 = dma.hbm_to_vmem [thread:$0]  %s1, 896, %s19, [#allocation3], 128, 128, 8
    $region9: #{_lambda_.1} parent=1 // pred_fallthru
      _
    // Predicated region
    $region10: #{_lambda_.1} parent=1 // pred_check
      _
    $region11: #{_lambda_.1} parent=1 // pred_check_branch
      %26 = sbr.rel (0) target = $region13
    $region12: #{_lambda_.1} parent=1 // pred_region
      %s28 = ssub.s32 640, 640
      %29 = vsyncadd [#allocation5], %s28
      %s30 = sshll.u32 [#allocation4], 4
      %s31 = int_to_ptr.vmem [resolvable:$true] %s30
      %36 = dma.hbm_to_vmem [thread:$0]  %s2, 640, %s31, [#allocation5], 128, 128, 8
    $region13: #{_lambda_.1} parent=1 // pred_fallthru
      _
    // Predicated region
    $region14: #{_lambda_.1} parent=1 // pred_check
      _
    $region15: #{_lambda_.1} parent=1 // pred_check_branch
      %38 = sbr.rel (0) target = $region17
    $region16: #{_lambda_.1} parent=1 // pred_region
      _
    $region17: #{_lambda_.1} parent=1 // pred_fallthru
      _
    // Predicated region
    $region18: #{_lambda_.1} parent=1 // pred_check
      _
    $region19: #{_lambda_.1} parent=1 // pred_check_branch
      %40 = sbr.rel (0) target = $region21
    $region20: #{_lambda_.1} parent=1 // pred_region
      %41 = dma.done [#allocation3], 896
    $region21: #{_lambda_.1} parent=1 // pred_fallthru
      _
    // Predicated region
    $region22: #{_lambda_.1} parent=1 // pred_check
      _
    $region23: #{_lambda_.1} parent=1 // pred_check_branch
      %43 = sbr.rel (0) target = $region25
    $region24: #{_lambda_.1} parent=1 // pred_region
      %44 = dma.done [#allocation5], 640
    $region25: #{_lambda_.1} parent=1 // pred_fallthru
      _
    %v45 = vld [vmem:[%s0] sm:$0xff]
    %v46 = vld [vmem:[#allocation2] sm:$0xff]
    %v47 = vld [vmem:[#allocation2 + $0x8] sm:$0xff]
    %v48 = vld [vmem:[#allocation2 + $0x10] sm:$0xff]
    %v49 = vld [vmem:[#allocation2 + $0x18] sm:$0xff]
    %v50 = vld [vmem:[#allocation2 + $0x20] sm:$0xff]
    %v51 = vld [vmem:[#allocation2 + $0x28] sm:$0xff]
    %v52 = vld [vmem:[#allocation2 + $0x30] sm:$0x1]
    %v53 = vlaneseq
    %v54 = vshrl.u32 %v53, 7
    %v55 = vsub.s32 0, %v54
    %v56 = vrot.slane %v52, %v55
    %vm57 = vcmask 392192
    %v59 = vsel %vm57, %v45, 0
    %61 = vmatprep.subr.mxu0 0.0
    %62 = vmatpush1.msra.mxu0 0.0
    %63 = vmatprep.subr.mxu0 0.0
    %64 = vmatpush1.msra.mxu0 0.0
    %65 = vmatprep.subr.mxu0 0.0
    %66 = vmatpush1.msra.mxu0 0.0
    %67 = vmatprep.subr.mxu0 0.0
    %68 = vmatpush1.msra.mxu0 0.0
    %69 = vmatprep.subr.mxu0 0.0
    %70 = vmatpush1.msra.mxu0 0.0
    %71 = vmatprep.subr.mxu0 0.0
    %72 = vmatpush1.msra.mxu0 0.0
    %73 = vmatprep.subr.mxu0 0.0
    %74 = vmatpush1.msra.mxu0 0.0
    %75 = vmatprep.subr.mxu0 0.0
    %76 = vmatpush1.msra.mxu0 0.0
    %77 = vmatprep.subr.mxu0 0.0
    %78 = vmatpush1.msra.mxu0 0.0
    %79 = vmatprep.subr.mxu0 0.0
    %80 = vmatpush1.msra.mxu0 0.0
    %81 = vmatprep.subr.mxu0 0.0
    %82 = vmatpush1.msra.mxu0 %v51
    %83 = vmatprep.subr.mxu0 0.0
    %84 = vmatpush1.msra.mxu0 %v50
    %85 = vmatprep.subr.mxu0 0.0
    %86 = vmatpush1.msra.mxu0 %v49
    %87 = vmatprep.subr.mxu0 0.0
    %88 = vmatpush1.msra.mxu0 %v48
    %89 = vmatprep.subr.mxu0 0.0
    %90 = vmatpush1.msra.mxu0 %v47
    %91 = vmatprep.subr.mxu0 0.0
    %92 = vmatpush1.msra.mxu0 %v46
    %93 = vmatprep.subr.mxu0 0.0
    %94 = vmatpush2.msra.mxu0 0.0
    %95 = vmatprep.subr.mxu0 0.0
    %96 = vmatpush2.msra.mxu0 0.0
    %97 = vmatprep.subr.mxu0 0.0
    %98 = vmatpush2.msra.mxu0 0.0
    %99 = vmatprep.subr.mxu0 0.0
    %100 = vmatpush2.msra.mxu0 0.0
    %101 = vmatprep.subr.mxu0 0.0
    %102 = vmatpush2.msra.mxu0 0.0
    %103 = vmatprep.subr.mxu0 0.0
    %104 = vmatpush2.msra.mxu0 0.0
    %105 = vmatprep.subr.mxu0 0.0
    %106 = vmatpush2.msra.mxu0 0.0
    %107 = vmatprep.subr.mxu0 0.0
    %108 = vmatpush2.msra.mxu0 0.0
    %109 = vmatprep.subr.mxu0 0.0
    %110 = vmatpush2.msra.mxu0 0.0
    %111 = vmatprep.subr.mxu0 0.0
    %112 = vmatpush2.msra.mxu0 0.0
    %113 = vmatprep.subr.mxu0 0.0
    %114 = vmatpush2.msra.mxu0 0.0
    %115 = vmatprep.subr.mxu0 0.0
    %116 = vmatpush2.msra.mxu0 0.0
    %117 = vmatprep.subr.mxu0 0.0
    %118 = vmatpush2.msra.mxu0 0.0
    %119 = vmatprep.subr.mxu0 0.0
    %120 = vmatpush2.msra.mxu0 0.0
    %121 = vmatprep.subr.mxu0 0.0
    %122 = vmatpush2.msra.mxu0 0.0
    %123 = vmatprep.subr.mxu0 0.0
    %124 = vmatpush2.msra.mxu0 0.0
    %125 = vmatprep.mubr.f32.mxu0 0.0
    %126 = vmatmul.mubr.f32.gmra.mxu0 %v59
    %v127 = vpop.f32.mrf.mxu0
    %v128 = vadd.f32 %v56, %v127
    %v129 = vpop.f32.mrf.mxu0
    %130 = vdwg.mxu0
    %v131 = vmax.f32 %v128, 0.0
    %v132 = vld [vmem:[#allocation4] sm:$0xff]
    %v133 = vld [vmem:[#allocation4 + $0x8] sm:$0xff]
    %v134 = vld [vmem:[#allocation4 + $0x10] sm:$0xff]
    %v135 = vld [vmem:[#allocation4 + $0x18] sm:$0xff]
    %v136 = vld [vmem:[#allocation4 + $0x20] sm:$0x1]
    %v137 = vlaneseq
    %v138 = vshrl.u32 %v137, 7
    %v139 = vsub.s32 0, %v138
    %v140 = vrot.slane %v136, %v139
    %vm141 = vcmask 261120
    %v143 = vsel %vm141, %v131, 0
    %145 = vmatprep.subr.mxu0 0.0
    %146 = vmatpush1.msra.mxu0 0.0
    %147 = vmatprep.subr.mxu0 0.0
    %148 = vmatpush1.msra.mxu0 0.0
    %149 = vmatprep.subr.mxu0 0.0
    %150 = vmatpush1.msra.mxu0 0.0
    %151 = vmatprep.subr.mxu0 0.0
    %152 = vmatpush1.msra.mxu0 0.0
    %153 = vmatprep.subr.mxu0 0.0
    %154 = vmatpush1.msra.mxu0 0.0
    %155 = vmatprep.subr.mxu0 0.0
    %156 = vmatpush1.msra.mxu0 0.0
    %157 = vmatprep.subr.mxu0 0.0
    %158 = vmatpush1.msra.mxu0 0.0
    %159 = vmatprep.subr.mxu0 0.0
    %160 = vmatpush1.msra.mxu0 0.0
    %161 = vmatprep.subr.mxu0 0.0
    %162 = vmatpush1.msra.mxu0 0.0
    %163 = vmatprep.subr.mxu0 0.0
    %164 = vmatpush1.msra.mxu0 0.0
    %165 = vmatprep.subr.mxu0 0.0
    %166 = vmatpush1.msra.mxu0 0.0
    %167 = vmatprep.subr.mxu0 0.0
    %168 = vmatpush1.msra.mxu0 0.0
    %169 = vmatprep.subr.mxu0 0.0
    %170 = vmatpush1.msra.mxu0 %v135
    %171 = vmatprep.subr.mxu0 0.0
    %172 = vmatpush1.msra.mxu0 %v134
    %173 = vmatprep.subr.mxu0 0.0
    %174 = vmatpush1.msra.mxu0 %v133
    %175 = vmatprep.subr.mxu0 0.0
    %176 = vmatpush1.msra.mxu0 %v132
    %177 = vmatprep.subr.mxu0 0.0
    %178 = vmatpush2.msra.mxu0 0.0
    %179 = vmatprep.subr.mxu0 0.0
    %180 = vmatpush2.msra.mxu0 0.0
    %181 = vmatprep.subr.mxu0 0.0
    %182 = vmatpush2.msra.mxu0 0.0
    %183 = vmatprep.subr.mxu0 0.0
    %184 = vmatpush2.msra.mxu0 0.0
    %185 = vmatprep.subr.mxu0 0.0
    %186 = vmatpush2.msra.mxu0 0.0
    %187 = vmatprep.subr.mxu0 0.0
    %188 = vmatpush2.msra.mxu0 0.0
    %189 = vmatprep.subr.mxu0 0.0
    %190 = vmatpush2.msra.mxu0 0.0
    %191 = vmatprep.subr.mxu0 0.0
    %192 = vmatpush2.msra.mxu0 0.0
    %193 = vmatprep.subr.mxu0 0.0
    %194 = vmatpush2.msra.mxu0 0.0
    %195 = vmatprep.subr.mxu0 0.0
    %196 = vmatpush2.msra.mxu0 0.0
    %197 = vmatprep.subr.mxu0 0.0
    %198 = vmatpush2.msra.mxu0 0.0
    %199 = vmatprep.subr.mxu0 0.0
    %200 = vmatpush2.msra.mxu0 0.0
    %201 = vmatprep.subr.mxu0 0.0
    %202 = vmatpush2.msra.mxu0 0.0
    %203 = vmatprep.subr.mxu0 0.0
    %204 = vmatpush2.msra.mxu0 0.0
    %205 = vmatprep.subr.mxu0 0.0
    %206 = vmatpush2.msra.mxu0 0.0
    %207 = vmatprep.subr.mxu0 0.0
    %208 = vmatpush2.msra.mxu0 0.0
    %209 = vmatprep.mubr.f32.mxu0 0.0
    %210 = vmatmul.mubr.f32.gmra.mxu0 %v143
    %v211 = vpop.f32.mrf.mxu0
    %v212 = vadd.f32 %v140, %v211
    %v213 = vpop.f32.mrf.mxu0
    %214 = vdwg.mxu0
    %v215 = vmax.f32 %v212, 0.0
    %v216 = vld [vmem:[%s3] sm:$0x1]
    %v217 = vld [vmem:[%s3 + $0x1] sm:$0x1]
    %v218 = vlaneseq
    %v219 = vshrl.u32 %v218, 7
    %v220 = vsub.s32 0, %v219
    %v221 = vrot.slane %v216, %v220
    %v222 = vmul.f32 %v215, %v221
    %vm223 = vcmask 130048
    %v224 = vsel %vm223, %v222, 0.0
    %225 = vadd.xlane.f32.xlu0 %v224
    %v226 = vpop.xlane.xlu0 %225
    %v227 = vlaneseq
    %v228 = vshrl.u32 %v227, 7
    %v229 = vsub.s32 0, %v228
    %v230 = vrot.slane %v217, %v229
    %v231 = vadd.f32 %v226, %v230
    %vm232 = vcmask 7168
    %233 = vst.msk [vmem:[%s4] sm:$0xff] %vm232, %v231
    // Predicated region
    $region26: #{_lambda_.1} parent=1 // pred_check
      _
    $region27: #{_lambda_.1} parent=1 // pred_check_branch
      %235 = sbr.rel (0) target = $region29
    $region28: #{_lambda_.1} parent=1 // pred_region
      _
    $region29: #{_lambda_.1} parent=1 // pred_fallthru
      _
    // Predicated region
    $region30: #{_lambda_.1} parent=1 // pred_check
      _
    $region31: #{_lambda_.1} parent=1 // pred_check_branch
      %237 = sbr.rel (0) target = $region33
    $region32: #{_lambda_.1} parent=1 // pred_region
      _
    $region33: #{_lambda_.1} parent=1 // pred_fallthru
      _
    %238 = vsyncpa [#allocation3], 1
    %239 = vsyncpa [#allocation5], 1

</llo_original>
